<compile_context>
chip_gen: v7x
topology: tpu7x:2x2x1
jax: 0.10.0
libtpu: 0.0.40
codegen_flags: <defaults>
</compile_context>

<pallas_src>
import functools
import math

import jax
import jax.numpy as jnp
import numpy as np
from jax.experimental import pallas as pl
from jax.experimental.pallas import tpu as pltpu


_VMEM_LIMIT = 32 * 1024 * 1024  # explicit scoped-VMEM budget (safe across v5e/v6e/v7x)
_CP_PAR1 = pltpu.CompilerParams(dimension_semantics=("parallel",),
                                vmem_limit_bytes=_VMEM_LIMIT)


def _row_tile(M, cap=256):
    """Fixed row-tile with cdiv grid; whole M only when it is already small."""
    return M if M <= cap else cap


# ----------------------------------------------------------------------------
# Pallas kernels
# ----------------------------------------------------------------------------
def _linear_kernel(x_ref, w_ref, b_ref, o_ref, *, act):
    x = x_ref[...].astype(jnp.bfloat16)
    w = w_ref[...].astype(jnp.bfloat16)
    y = jnp.dot(x, w, preferred_element_type=jnp.float32) + b_ref[...]
    if act == "relu":
        y = jnp.maximum(y, 0.0)
    elif act == "gelu":
        # TODO(synk): PyTorch nn.GELU defaults to exact erf; tanh approximation used here.
        y = jax.nn.gelu(y)
    o_ref[...] = y.astype(o_ref.dtype)


def linear(x, w, b, act="none"):
    """y = act(x @ w + b).  x:(M,K)  w:(K,N)  b:(N,).  bf16 MXU operands, f32 accum."""
    # TODO(synk): for very large (K,N) weights (real ViT FFN) tile over N/K with an f32
    #             accumulator to stay under v5e's 16 MiB scoped VMEM; unneeded at this size.
    M, K = x.shape
    N = w.shape[1]
    tm = _row_tile(M)
    return pl.pallas_call(
        functools.partial(_linear_kernel, act=act),
        out_shape=jax.ShapeDtypeStruct((M, N), x.dtype),
        grid=(pl.cdiv(M, tm),),
        in_specs=[
            pl.BlockSpec((tm, K), lambda i: (i, 0)),
            pl.BlockSpec((K, N), lambda i: (0, 0)),
            pl.BlockSpec((1, N), lambda i: (0, 0)),
        ],
        out_specs=pl.BlockSpec((tm, N), lambda i: (i, 0)),
        compiler_params=_CP_PAR1,
    )(x, w, b.reshape(1, N))


def _linear_res_ln_kernel(x_ref, w_ref, b_ref, r_ref, g_ref, bln_ref, o_ref, *, eps):
    x = x_ref[...].astype(jnp.bfloat16)
    w = w_ref[...].astype(jnp.bfloat16)
    y = jnp.dot(x, w, preferred_element_type=jnp.float32)
    y = y + b_ref[...] + r_ref[...].astype(jnp.float32)
    mu = jnp.mean(y, axis=-1, keepdims=True)
    yc = y - mu
    var = jnp.mean(yc * yc, axis=-1, keepdims=True)
    inv = jax.lax.rsqrt(var + eps)
    o_ref[...] = (yc * inv * g_ref[...] + bln_ref[...]).astype(o_ref.dtype)


def linear_res_ln(x, w, b, res, gamma, beta, eps=1e-5):
    """LayerNorm(res + x @ w + b) fused in one kernel (out-proj / FFN-tail epilogue)."""
    M, K = x.shape
    N = w.shape[1]
    tm = _row_tile(M)
    return pl.pallas_call(
        functools.partial(_linear_res_ln_kernel, eps=eps),
        out_shape=jax.ShapeDtypeStruct((M, N), x.dtype),
        grid=(pl.cdiv(M, tm),),
        in_specs=[
            pl.BlockSpec((tm, K), lambda i: (i, 0)),
            pl.BlockSpec((K, N), lambda i: (0, 0)),
            pl.BlockSpec((1, N), lambda i: (0, 0)),
            pl.BlockSpec((tm, N), lambda i: (i, 0)),
            pl.BlockSpec((1, N), lambda i: (0, 0)),
            pl.BlockSpec((1, N), lambda i: (0, 0)),
        ],
        out_specs=pl.BlockSpec((tm, N), lambda i: (i, 0)),
        compiler_params=_CP_PAR1,
    )(x, w, b.reshape(1, N), res, gamma.reshape(1, N), beta.reshape(1, N))


def _ln_kernel(x_ref, g_ref, b_ref, o_ref, *, eps):
    x = x_ref[...].astype(jnp.float32)
    mu = jnp.mean(x, axis=-1, keepdims=True)
    xc = x - mu
    var = jnp.mean(xc * xc, axis=-1, keepdims=True)
    inv = jax.lax.rsqrt(var + eps)
    o_ref[...] = (xc * inv * g_ref[...] + b_ref[...]).astype(o_ref.dtype)


def layer_norm(x, gamma, beta, eps=1e-5):
    """LayerNorm(x) over last dim, no residual, f32 math."""
    M, D = x.shape
    tm = _row_tile(M)
    return pl.pallas_call(
        functools.partial(_ln_kernel, eps=eps),
        out_shape=jax.ShapeDtypeStruct((M, D), x.dtype),
        grid=(pl.cdiv(M, tm),),
        in_specs=[
            pl.BlockSpec((tm, D), lambda i: (i, 0)),
            pl.BlockSpec((1, D), lambda i: (0, 0)),
            pl.BlockSpec((1, D), lambda i: (0, 0)),
        ],
        out_specs=pl.BlockSpec((tm, D), lambda i: (i, 0)),
        compiler_params=_CP_PAR1,
    )(x, gamma.reshape(1, D), beta.reshape(1, D))


def _attention_kernel(q_ref, k_ref, v_ref, o_ref, *, scale):
    q = q_ref[...].astype(jnp.bfloat16)
    k = k_ref[...].astype(jnp.bfloat16)
    s = jnp.einsum("bqd,bkd->bqk", q, k, preferred_element_type=jnp.float32) * scale
    s = s - jnp.max(s, axis=-1, keepdims=True)
    p = jnp.exp(s)
    denom = jnp.sum(p, axis=-1, keepdims=True)
    p = p * pl.reciprocal(denom, approx=True)
    o = jnp.einsum("bqk,bkd->bqd", p.astype(jnp.bfloat16),
                   v_ref[...].astype(jnp.bfloat16),
                   preferred_element_type=jnp.float32)
    o_ref[...] = o.astype(o_ref.dtype)


def _head_group(bh):
    for g in (16, 8, 4, 2, 1):
        if bh % g == 0:
            return g
    return 1


def sdpa(q, k, v, scale):
    """Scaled dot-product attention, gridded over batch*head. q:(BH,Lq,Dh) k,v:(BH,Lk,Dh)."""
    BH, Lq, Dh = q.shape
    Lk = k.shape[1]
    g = _head_group(BH)
    return pl.pallas_call(
        functools.partial(_attention_kernel, scale=scale),
        out_shape=jax.ShapeDtypeStruct((BH, Lq, Dh), q.dtype),
        grid=(BH // g,),
        in_specs=[
            pl.BlockSpec((g, Lq, Dh), lambda i: (i, 0, 0)),
            pl.BlockSpec((g, Lk, Dh), lambda i: (i, 0, 0)),
            pl.BlockSpec((g, Lk, Dh), lambda i: (i, 0, 0)),
        ],
        out_specs=pl.BlockSpec((g, Lq, Dh), lambda i: (i, 0, 0)),
        compiler_params=_CP_PAR1,
    )(q, k, v)


# ----------------------------------------------------------------------------
# Model pieces built from the kernels (glue in plain JAX)
# ----------------------------------------------------------------------------
def multi_head_attention(query, kv, p, nhead, self_attn):
    """PyTorch-style MHA core, seq-first. Returns pre-out-projection context (L*N, E)."""
    # TODO(synk): at real Dh the head split/merge transposes should move inside the
    #             attention kernel via BlockSpec head slicing.
    L, N, E = query.shape
    S = kv.shape[0]
    Dh = E // nhead
    if self_attn:
        qkv = linear(query.reshape(L * N, E), p["w_qkv"], p["b_qkv"])  # fused QKV
        q, k, v = jnp.split(qkv, 3, axis=-1)
    else:
        q = linear(query.reshape(L * N, E), p["w_qkv"][:, :E], p["b_qkv"][:E])
        kvp = linear(kv.reshape(S * N, E), p["w_qkv"][:, E:], p["b_qkv"][E:])  # fused KV
        k, v = jnp.split(kvp, 2, axis=-1)
    q = q.reshape(L, N, nhead, Dh).transpose(1, 2, 0, 3).reshape(N * nhead, L, Dh)
    k = k.reshape(S, N, nhead, Dh).transpose(1, 2, 0, 3).reshape(N * nhead, S, Dh)
    v = v.reshape(S, N, nhead, Dh).transpose(1, 2, 0, 3).reshape(N * nhead, S, Dh)
    o = sdpa(q, k, v, scale=1.0 / math.sqrt(Dh))            # (N*nhead, L, Dh)
    o = o.reshape(N, nhead, L, Dh).transpose(2, 0, 1, 3).reshape(L * N, E)
    return o


def decoder_layer(tgt, memory, p, nhead):
    """nn.TransformerDecoderLayer (post-norm, relu, eval-mode / no dropout)."""
    L, N, E = tgt.shape
    sa = multi_head_attention(tgt, tgt, p["self_attn"], nhead, self_attn=True)
    x = linear_res_ln(sa, p["self_attn"]["wo"], p["self_attn"]["bo"],
                      tgt.reshape(-1, E), p["ln1_g"], p["ln1_b"]).reshape(L, N, E)
    ca = multi_head_attention(x, memory, p["cross_attn"], nhead, self_attn=False)
    x = linear_res_ln(ca, p["cross_attn"]["wo"], p["cross_attn"]["bo"],
                      x.reshape(-1, E), p["ln2_g"], p["ln2_b"]).reshape(L, N, E)
    h = linear(x.reshape(-1, E), p["w1"], p["b1"], act="relu")
    x = linear_res_ln(h, p["w2"], p["b2"], x.reshape(-1, E),
                      p["ln3_g"], p["ln3_b"]).reshape(L, N, E)
    return x


def encoder_layer(x, p, nhead):
    """ViT-style pre-norm encoder block, batch-first x:(B,S,E)."""
    B, S, E = x.shape
    xn = layer_norm(x.reshape(-1, E), p["ln1_g"], p["ln1_b"]).reshape(B, S, E)
    xn_sf = xn.transpose(1, 0, 2)                            # seq-first for shared MHA core
    ctx = multi_head_attention(xn_sf, xn_sf, p["attn"], nhead, self_attn=True)
    attn = linear(ctx, p["attn"]["wo"], p["attn"]["bo"]).reshape(S, B, E)
    x = x + attn.transpose(1, 0, 2)
    xn = layer_norm(x.reshape(-1, E), p["ln2_g"], p["ln2_b"])
    h = linear(xn, p["w1"], p["b1"], act="gelu")
    h = linear(h, p["w2"], p["b2"])
    return x + h.reshape(B, S, E)


def patchify(x, P):
    """Matches MaskedImageModeling.patchify: NCHW -> (B, Np, P*P*C)."""
    B, C, H, W = x.shape
    x = x.reshape(B, C, H // P, P, W // P, P)
    x = x.transpose(0, 2, 4, 3, 5, 1).reshape(B, (H // P) * (W // P), P * P * C)
    return x


def vit_encoder(x, p, patch_size, nhead):
    """Synthetic ViT-style image encoder; returns last_hidden_state (B, Np+1, E)."""
    B, C, H, W = x.shape
    P = patch_size
    patches = patchify(x, P)                                 # (B, Np, P*P*C)
    Np = patches.shape[1]
    E = p["patch_w"].shape[1]
    emb = linear(patches.reshape(B * Np, P * P * C), p["patch_w"], p["patch_b"])
    emb = emb.reshape(B, Np, E)
    cls = jnp.broadcast_to(p["cls_token"], (B, 1, E))
    h = jnp.concatenate([cls, emb], axis=1) + p["pos_emb"]   # (B, Np+1, E)
    for lp in p["layers"]:
        h = encoder_layer(h, lp, nhead)
    h = layer_norm(h.reshape(-1, E), p["ln_f_g"], p["ln_f_b"]).reshape(B, Np + 1, E)
    return h


def masked_image_modeling_forward(params, x, mask_key, mask_probability=0.15, *,
                                  patch_size, enc_heads, dec_heads):
    """Forward pass of MaskedImageModeling. Returns (reconstructed_patches, mask)."""
    B, C, H, W = x.shape
    P = patch_size

    last_hidden = vit_encoder(x, params["encoder"], P, enc_heads)
    patch_embeddings = last_hidden[:, 1:, :]                 # drop CLS -> (B, Np, E)
    _, Np, E = patch_embeddings.shape

    # apply_mask: torch.rand(B, Np) < p; the select is trivial elementwise -> plain jnp
    mask = jax.random.uniform(mask_key, (B, Np)) < mask_probability
    masked_embeddings = jnp.where(mask[:, :, None],
                                  params["mask_token"][None, None, :],
                                  patch_embeddings)

    # nn.TransformerDecoder, batch_first=False: axis0 = sequence, axis1 = batch,
    # mirroring the reference module's convention of passing batch-first tensors.
    tgt = masked_embeddings
    memory = patch_embeddings
    for lp in params["decoder_layers"]:
        tgt = decoder_layer(tgt, memory, lp, dec_heads)

    recon = linear(tgt.reshape(B * Np, E), params["head_w"], params["head_b"])
    recon = recon.reshape(B, Np, P * P * 3)
    return recon, mask


# ----------------------------------------------------------------------------
# Deterministic parameter initialization (synthetic weights)
# ----------------------------------------------------------------------------
def _dense(key, shape, std=0.02):
    return (jax.random.normal(key, shape) * std).astype(jnp.float32)


def _zeros(n):
    return jnp.zeros((n,), jnp.float32)


def _ones(n):
    return jnp.ones((n,), jnp.float32)


def init_mha_params(key, E):
    k = jax.random.split(key, 2)
    return dict(w_qkv=_dense(k[0], (E, 3 * E)), b_qkv=_zeros(3 * E),
                wo=_dense(k[1], (E, E)), bo=_zeros(E))


def init_decoder_layer_params(key, E, ffn):
    k = jax.random.split(key, 4)
    return dict(self_attn=init_mha_params(k[0], E),
                cross_attn=init_mha_params(k[1], E),
                w1=_dense(k[2], (E, ffn)), b1=_zeros(ffn),
                w2=_dense(k[3], (ffn, E)), b2=_zeros(E),
                ln1_g=_ones(E), ln1_b=_zeros(E),
                ln2_g=_ones(E), ln2_b=_zeros(E),
                ln3_g=_ones(E), ln3_b=_zeros(E))


def init_encoder_layer_params(key, E, mlp):
    k = jax.random.split(key, 3)
    return dict(attn=init_mha_params(k[0], E),
                w1=_dense(k[1], (E, mlp)), b1=_zeros(mlp),
                w2=_dense(k[2], (mlp, E)), b2=_zeros(E),
                ln1_g=_ones(E), ln1_b=_zeros(E),
                ln2_g=_ones(E), ln2_b=_zeros(E))


def init_params(key, *, hidden_size, patch_size, img_size, in_chans=3,
                num_decoder_layers=8, num_encoder_layers=2, dec_ffn=2048):
    E = hidden_size
    Np = (img_size // patch_size) ** 2
    keys = jax.random.split(key, 6 + num_encoder_layers + num_decoder_layers)
    encoder = dict(
        patch_w=_dense(keys[0], (patch_size * patch_size * in_chans, E)),
        patch_b=_zeros(E),
        cls_token=_dense(keys[1], (1, 1, E)),
        pos_emb=_dense(keys[2], (1, Np + 1, E)),
        layers=[init_encoder_layer_params(keys[6 + i], E, 4 * E)
                for i in range(num_encoder_layers)],
        ln_f_g=_ones(E), ln_f_b=_zeros(E),
    )
    decoder_layers = [init_decoder_layer_params(keys[6 + num_encoder_layers + i], E, dec_ffn)
                      for i in range(num_decoder_layers)]
    return dict(
        encoder=encoder,
        decoder_layers=decoder_layers,
        mask_token=jax.random.normal(keys[3], (E,)).astype(jnp.float32),
        head_w=_dense(keys[4], (E, patch_size * patch_size * 3)),
        head_b=_zeros(patch_size * patch_size * 3),
    )


# ----------------------------------------------------------------------------
# Main
# ----------------------------------------------------------------------------
if __name__ == "__main__":
    key = jax.random.PRNGKey(0)
    k_param, k_x, k_mask = jax.random.split(key, 3)

    B, C, H, W = 2, 3, 16, 16
    hidden_size, patch_size = 32, 4          # num_patches = 16
    enc_heads, dec_heads = 4, 8

    params = init_params(k_param, hidden_size=hidden_size, patch_size=patch_size,
                         img_size=H, num_decoder_layers=8)
    x = jax.random.normal(k_x, (B, C, H, W), dtype=jnp.float32)

    # Quick correctness spot-checks of the core Pallas kernels against jnp references.
    xt = jax.random.normal(jax.random.PRNGKey(1), (32, 32), jnp.float32)
    wt = jax.random.normal(jax.random.PRNGKey(2), (32, 48), jnp.float32)
    bt = jax.random.normal(jax.random.PRNGKey(3), (48,), jnp.float32)
    ref_lin = jnp.dot(xt.astype(jnp.bfloat16), wt.astype(jnp.bfloat16),
                      preferred_element_type=jnp.float32) + bt
    np.testing.assert_allclose(np.asarray(linear(xt, wt, bt)), np.asarray(ref_lin),
                               rtol=1e-2, atol=1e-2)
    gt = jax.random.normal(jax.random.PRNGKey(4), (32,), jnp.float32)
    ref_ln = (xt - xt.mean(-1, keepdims=True)) / jnp.sqrt(xt.var(-1, keepdims=True) + 1e-5)
    np.testing.assert_allclose(np.asarray(layer_norm(xt, gt, bt[:32])),
                               np.asarray(ref_ln * gt + bt[:32]), rtol=1e-3, atol=1e-3)

    fwd = jax.jit(functools.partial(masked_image_modeling_forward,
                                    patch_size=patch_size,
                                    enc_heads=enc_heads,
                                    dec_heads=dec_heads))
    recon, mask = fwd(params, x, k_mask, 0.15)
    recon, mask = jax.block_until_ready((recon, mask))

    Np = (H // patch_size) * (W // patch_size)
    assert recon.shape == (B, Np, patch_size * patch_size * 3), recon.shape
    assert mask.shape == (B, Np) and mask.dtype == jnp.bool_, (mask.shape, mask.dtype)
    assert bool(jnp.all(jnp.isfinite(recon)))

    print("KERNEL_OK")
</pallas_src>

<mosaic_0001>
module attributes {stable_mosaic.version = 11 : i64} {
  func.func @_linear_kernel(%arg0: i32, %arg1: memref<32x32xf32, #tpu.memory_space<vmem>>, %arg2: memref<32x48xf32, #tpu.memory_space<vmem>>, %arg3: memref<1x48xf32, #tpu.memory_space<vmem>>, %arg4: memref<32x48xf32, #tpu.memory_space<vmem>>) attributes {dimension_semantics = [#tpu.dimension_semantics<parallel>], iteration_bounds = array<i64: 1>, scalar_prefetch = 0 : i64, scratch_operands = 0 : i64, tpu.core_type = #tpu.core_type<tc>, window_params = [{transform_indices = @transform_0, window_bounds = array<i64: 32, 32>}, {pipeline_mode = #tpu.pipeline_mode<synchronous>, transform_indices = @transform_1, window_bounds = array<i64: 32, 48>}, {pipeline_mode = #tpu.pipeline_mode<synchronous>, transform_indices = @transform_2, window_bounds = array<i64: 1, 48>}, {transform_indices = @transform_3, window_bounds = array<i64: 32, 48>}]} {
    %c0 = arith.constant 0 : index
    %c0_0 = arith.constant 0 : index
    %0 = vector.load %arg1[%c0, %c0_0] : memref<32x32xf32, #tpu.memory_space<vmem>>, vector<32x32xf32>
    %1 = arith.truncf %0 : vector<32x32xf32> to vector<32x32xbf16>
    %c0_1 = arith.constant 0 : index
    %c0_2 = arith.constant 0 : index
    %2 = vector.load %arg2[%c0_1, %c0_2] : memref<32x48xf32, #tpu.memory_space<vmem>>, vector<32x48xf32>
    %3 = arith.truncf %2 : vector<32x48xf32> to vector<32x48xbf16>
    %cst = arith.constant dense<0.000000e+00> : vector<32x48xf32>
    %4 = tpu.matmul %1, %3, %cst {dimension_numbers = #tpu.dot_dimension_numbers<[1], [0], [0], [1], [0, 0, 1, 1], [], []>} : vector<32x32xbf16>, vector<32x48xbf16>, vector<32x48xf32> -> vector<32x48xf32>
    %c0_3 = arith.constant 0 : index
    %c0_4 = arith.constant 0 : index
    %5 = vector.load %arg3[%c0_3, %c0_4] : memref<1x48xf32, #tpu.memory_space<vmem>>, vector<1x48xf32>
    %6 = vector.broadcast %5 : vector<1x48xf32> to vector<32x48xf32>
    %7 = arith.addf %4, %6 : vector<32x48xf32>
    %c0_5 = arith.constant 0 : index
    %c0_6 = arith.constant 0 : index
    %8 = vector.load %arg4[%c0_5, %c0_6] : memref<32x48xf32, #tpu.memory_space<vmem>>, vector<32x48xf32>
    tpu.vector_store %arg4[%c0_5, %c0_6], %7 {strides = array<i32>} : memref<32x48xf32, #tpu.memory_space<vmem>>, vector<32x48xf32>,
    return
  }
  func.func @transform_0(%arg0: i32) -> (i32, i32) {
    %c0_i32 = arith.constant 0 : i32
    %c0_i32_0 = arith.constant 0 : i32
    return %arg0, %c0_i32 : i32, i32
  }
  func.func @transform_1(%arg0: i32) -> (i32, i32) {
    %c0_i32 = arith.constant 0 : i32
    %c0_i32_0 = arith.constant 0 : i32
    %c0_i32_1 = arith.constant 0 : i32
    return %c0_i32, %c0_i32_0 : i32, i32
  }
  func.func @transform_2(%arg0: i32) -> (i32, i32) {
    %c0_i32 = arith.constant 0 : i32
    %c0_i32_0 = arith.constant 0 : i32
    %c0_i32_1 = arith.constant 0 : i32
    return %c0_i32, %c0_i32_0 : i32, i32
  }
  func.func @transform_3(%arg0: i32) -> (i32, i32) {
    %c0_i32 = arith.constant 0 : i32
    %c0_i32_0 = arith.constant 0 : i32
    return %arg0, %c0_i32 : i32, i32
  }
}

</mosaic_0001>

<llo_original>
// kernel: tpu_custom_call.1
$region0: #{tpu_custom_call.1}
  #allocation0 [shape = 'u32[]', space=smem, size = 0x4, offset = 0x4, fixed_abs, tag = 'smem constant byte address 0x4 - core index']
  #allocation1 [shape = 'u32[144,128]{1,0:T(1,128)}', space=vmem, size = 0x12000, scoped, tag = 'internal scratch']
  %s0 = inlined_call_operand.hbm [shape: f32[32,32], index: 0, kind: input, shape index: {}]
  %s1 = inlined_call_operand.hbm [shape: f32[32,48], index: 1, kind: input, shape index: {}]
  %s2 = inlined_call_operand.vmem [shape: f32[1,48], index: 2, kind: input, shape index: {}]
  %s3 = inlined_call_operand.hbm [shape: f32[32,48], index: 3, kind: output, shape index: {}]
  %s4 = sld [smem:[#allocation0]]
  $region30: #{tpu_custom_call.1} parent=0
    _
  %s6 = ssub.s32 1, %s4
  %s7 = scalar_select 0, %s6, %s4
  $region1: #{tpu_custom_call.1} parent=0
    #allocation2 [shape = 'u8[16384]{0}', space=vmem, size = 0x4000, scoped, tag = 'input window, operand 0, single buffered']
    #allocation3 [shape = 's32[1]{0}', space=sflag, size = 0x4, scoped, tag = 'scoped memory for tpu_custom_call.1']
    #allocation4 [shape = 's32[1]{0}', space=sflag, size = 0x4, scoped, tag = 'scoped memory for tpu_custom_call.1']
    #allocation5 [shape = 'u8[16384]{0}', space=vmem, size = 0x4000, scoped, tag = 'input window, operand 1, single buffered']
    #allocation6 [shape = 's32[1]{0}', space=sflag, size = 0x4, scoped, tag = 'scoped memory for tpu_custom_call.1']
    #allocation7 [shape = 'u8[16384]{0}', space=vmem, size = 0x4000, scoped, tag = 'output window, operand 0, single buffered']
    %8 = vsyncpa [#allocation3], 0
    %9 = vsyncpa [#allocation6], 0
    %10 = vsyncpa [#allocation4], 0
    // Predicated region
    $region2: #{tpu_custom_call.1} parent=1 // pred_check
      _
    $region3: #{tpu_custom_call.1} parent=1 // pred_check_branch
      %12 = sbr.rel (0) target = $region5
    $region4: #{tpu_custom_call.1} parent=1 // pred_region
      %s14 = ssub.s32 512, 512
      %15 = vsyncadd [#allocation3], %s14
      %s16 = sshll.u32 [#allocation2], 4
      %s17 = int_to_ptr.vmem [resolvable:$true] %s16
      %22 = dma.hbm_to_vmem [thread:$0]  %s0, 512, %s17, [#allocation3], 128, 128, 8
    $region5: #{tpu_custom_call.1} parent=1 // pred_fallthru
      _
    // Predicated region
    $region6: #{tpu_custom_call.1} parent=1 // pred_check
      _
    $region7: #{tpu_custom_call.1} parent=1 // pred_check_branch
      %24 = sbr.rel (0) target = $region9
    $region8: #{tpu_custom_call.1} parent=1 // pred_region
      %s26 = ssub.s32 512, 512
      %27 = vsyncadd [#allocation6], %s26
      %s28 = sshll.u32 [#allocation5], 4
      %s29 = int_to_ptr.vmem [resolvable:$true] %s28
      %34 = dma.hbm_to_vmem [thread:$0]  %s1, 512, %s29, [#allocation6], 128, 128, 8
    $region9: #{tpu_custom_call.1} parent=1 // pred_fallthru
      _
    // Predicated region
    $region10: #{tpu_custom_call.1} parent=1 // pred_check
      _
    $region11: #{tpu_custom_call.1} parent=1 // pred_check_branch
      %36 = sbr.rel (0) target = $region13
    $region12: #{tpu_custom_call.1} parent=1 // pred_region
      _
    $region13: #{tpu_custom_call.1} parent=1 // pred_fallthru
      _
    // Predicated region
    $region14: #{tpu_custom_call.1} parent=1 // pred_check
      _
    $region15: #{tpu_custom_call.1} parent=1 // pred_check_branch
      %38 = sbr.rel (0) target = $region17
    $region16: #{tpu_custom_call.1} parent=1 // pred_region
      %39 = dma.done [#allocation3], 512
    $region17: #{tpu_custom_call.1} parent=1 // pred_fallthru
      _
    // Predicated region
    $region18: #{tpu_custom_call.1} parent=1 // pred_check
      _
    $region19: #{tpu_custom_call.1} parent=1 // pred_check_branch
      %41 = sbr.rel (0) target = $region21
    $region20: #{tpu_custom_call.1} parent=1 // pred_region
      %42 = dma.done [#allocation6], 512
    $region21: #{tpu_custom_call.1} parent=1 // pred_fallthru
      _
    %v44 = vld [vmem:[#allocation2] sm:$0xff]
    %v45 = vld [vmem:[#allocation2 + $0x8] sm:$0xff]
    %v46 = vld [vmem:[#allocation2 + $0x10] sm:$0xff]
    %v47 = vld [vmem:[#allocation2 + $0x18] sm:$0xff]
    %v48 = vpack.c.bf16 %v45, %v44
    %v49 = vpack.c.bf16 %v47, %v46
    %v50 = vld [vmem:[#allocation5] sm:$0xff]
    %v51 = vld [vmem:[#allocation5 + $0x8] sm:$0xff]
    %v52 = vld [vmem:[#allocation5 + $0x10] sm:$0xff]
    %v53 = vld [vmem:[#allocation5 + $0x18] sm:$0xff]
    %v54 = vpack.c.bf16 %v51, %v50
    %v55 = vpack.c.bf16 %v53, %v52
    %v56 = vld [vmem:[%s2] sm:$0x1]
    %v58 = vlaneseq
    %v59 = vshrl.u32 %v58, 7
    %v60 = vsub.s32 0, %v59
    %v61 = vrot.slane %v56, %v60
    %vm63 = vcmask 261120
    %v65 = vsel %vm63, %v48, 0
    %v68 = vsel %vm63, %v49, 0
    %70 = vmatprep.subr.bf16.mxu0 0
    %71 = vmatpush1.bf16.msra.mxu0 %v54
    %72 = vmatprep.subr.bf16.mxu0 0
    %73 = vmatpush1.bf16.msra.mxu0 %v55
    %74 = vmatprep.subr.bf16.mxu0 0
    %75 = vmatpush1.bf16.msra.mxu0 0
    %76 = vmatprep.subr.bf16.mxu0 0
    %77 = vmatpush1.bf16.msra.mxu0 0
    %78 = vmatprep.subr.bf16.mxu0 0
    %79 = vmatpush1.bf16.msra.mxu0 0
    %80 = vmatprep.subr.bf16.mxu0 0
    %81 = vmatpush1.bf16.msra.mxu0 0
    %82 = vmatprep.subr.bf16.mxu0 0
    %83 = vmatpush1.bf16.msra.mxu0 0
    %84 = vmatprep.subr.bf16.mxu0 0
    %85 = vmatpush1.bf16.msra.mxu0 0
    %86 = vmatprep.subr.bf16.mxu0 0
    %87 = vmatpush1.bf16.msra.mxu0 0
    %88 = vmatprep.subr.bf16.mxu0 0
    %89 = vmatpush1.bf16.msra.mxu0 0
    %90 = vmatprep.subr.bf16.mxu0 0
    %91 = vmatpush1.bf16.msra.mxu0 0
    %92 = vmatprep.subr.bf16.mxu0 0
    %93 = vmatpush1.bf16.msra.mxu0 0
    %94 = vmatprep.subr.bf16.mxu0 0
    %95 = vmatpush1.bf16.msra.mxu0 0
    %96 = vmatprep.subr.bf16.mxu0 0
    %97 = vmatpush1.bf16.msra.mxu0 0
    %98 = vmatprep.subr.bf16.mxu0 0
    %99 = vmatpush1.bf16.msra.mxu0 0
    %100 = vmatprep.subr.bf16.mxu0 0
    %101 = vmatpush1.bf16.msra.mxu0 0
    %102 = vmatprep.mubr.bf16.mxu0 0
    %103 = vmatmul.mubr.bf16.gmra.mrb[0].mxu0 %v65
    %v104 = vpop.f32.mrb[0].mxu0
    %v105 = vadd.f32 %v61, %v104
    %v106 = vpop.f32.mrb[0].mxu0
    %v107 = vpop.f32.mrb[0].mxu0
    %v108 = vadd.f32 %v61, %v107
    %v109 = vpop.f32.mrb[0].mxu0
    %110 = vmatprep.mubr.bf16.mxu0 0
    %111 = vmatmul.mubr.bf16.gmra.mrb[0].mxu0 %v68
    %v112 = vpop.f32.mrb[0].mxu0
    %v113 = vadd.f32 %v61, %v112
    %v114 = vpop.f32.mrb[0].mxu0
    %v115 = vpop.f32.mrb[0].mxu0
    %v116 = vadd.f32 %v61, %v115
    %v117 = vpop.f32.mrb[0].mxu0
    %118 = vdwg.mxu0
    %vm119 = vcmask 392192
    %120 = vst.msk [vmem:[#allocation7] sm:$0xff] %vm119, %v105
    %121 = vst.msk [vmem:[#allocation7 + $0x8] sm:$0xff] %vm119, %v108
    %122 = vst.msk [vmem:[#allocation7 + $0x10] sm:$0xff] %vm119, %v113
    %123 = vst.msk [vmem:[#allocation7 + $0x18] sm:$0xff] %vm119, %v116
    // Predicated region
    $region22: #{tpu_custom_call.1} parent=1 // pred_check
      _
    $region23: #{tpu_custom_call.1} parent=1 // pred_check_branch
      %125 = sbr.rel (0) target = $region25
    $region24: #{tpu_custom_call.1} parent=1 // pred_region
      %s127 = ssub.s32 512, 512
      %128 = vsyncadd [#allocation4], %s127
      %s129 = sshll.u32 [#allocation7], 4
      %s130 = int_to_ptr.vmem [resolvable:$true] %s129
      %135 = dma.vmem_to_hbm [thread:$0]  %s130, 512, %s3, [#allocation4], 128, 128, 8
    $region25: #{tpu_custom_call.1} parent=1 // pred_fallthru
      _
    // Predicated region
    $region26: #{tpu_custom_call.1} parent=1 // pred_check
      _
    $region27: #{tpu_custom_call.1} parent=1 // pred_check_branch
      %137 = sbr.rel (0) target = $region29
    $region28: #{tpu_custom_call.1} parent=1 // pred_region
      %138 = dma.done [#allocation4], 512
    $region29: #{tpu_custom_call.1} parent=1 // pred_fallthru
      _
    %139 = vsyncpa [#allocation3], 1
    %140 = vsyncpa [#allocation6], 1
    %141 = vsyncpa [#allocation4], 1

</llo_original>
